<compile_context>
chip_gen: v6e
topology: v6e:2x2x1
jax: 0.10.0
libtpu: 0.0.40
codegen_flags: <defaults>
</compile_context>

<pallas_src>
import functools

import jax
import jax.numpy as jnp
import numpy as np
from jax.experimental import pallas as pl
from jax.experimental.pallas import tpu as pltpu


def _sppfa_kernel(x_ref, w1t_ref, b1_ref, w2_ref, b2_ref, fc1t_ref, fc2_ref,
                  s_ref, *, H, W):
    """Per-image SPPFA SE-gate.

    Layout: channels on sublanes, flattened H*W pixels on lanes (lane-dense).
      x_ref   : (C1, H*W)   image (free NCHW reshape, no transpose)
      w1t_ref : (C_, C1)    cv1 weight, transposed
      b1_ref  : (C_, 1)     cv1 bias (column)
      w2_ref  : (4*C_, C2)  cv2 weight (natural (in, out))
      b2_ref  : (1, C2)     cv2 bias (row)
      fc1t_ref: (Cr, C2)    fc1 weight, transposed
      fc2_ref : (Cr, C2)    fc2 weight (natural (in, out))
      s_ref   : (1, C2)     SE gate for this image
    """
    C1, P = x_ref.shape
    C_ = w1t_ref.shape[0]
    NEG = float("-inf")

    # ---- cv1: 1x1 conv == channel matmul (MXU), pixels lane-dense --------------
    x1 = (jnp.dot(w1t_ref[...], x_ref[...], preferred_element_type=jnp.float32)
          + b1_ref[...])                                       # (C_, P) f32

    # ---- separable 5x5 / stride-1 / pad-2 max pool, all value-level ------------
    lane = jax.lax.broadcasted_iota(jnp.int32, (C_, P), dimension=1)
    # w-coordinate of each lane (cheap bitwise AND when W is a power of two).
    col = (lane & (W - 1)) if (W & (W - 1)) == 0 else (lane % W)
    w_taps = ((1, col < (W - 1)), (2, col < (W - 2)),
              (-1, col >= 1), (-2, col >= 2))

    def shifted(t, amt):
        # t at flat-pixel offset +amt; the vacated head/tail is filled with -inf.
        rows = t.shape[0]
        if amt > 0:
            return jnp.concatenate(
                [t[:, amt:], jnp.full((rows, amt), NEG, t.dtype)], axis=1)
        return jnp.concatenate(
            [jnp.full((rows, -amt), NEG, t.dtype), t[:, :amt]], axis=1)

    def maxpool5(t):
        # W pass: mask taps that would leak across an image-row boundary on the
        # merged H*W lane axis.
        m = t
        for d, ok in w_taps:
            m = jnp.maximum(m, jnp.where(ok, shifted(t, d), NEG))
        # H pass: +-1/+-2 rows are lane offsets of +-W/+-2W; the -inf fill in
        # `shifted` is exactly the out-of-image padding, so no extra mask.
        o = m
        for d in (W, 2 * W, -W, -2 * W):
            o = jnp.maximum(o, shifted(m, d))
        return o

    y1 = maxpool5(x1)
    y2 = maxpool5(y1)
    y3 = maxpool5(y2)

    # ---- global average pool hoisted ABOVE cv2 (cv2 is linear => exact) --------
    inv_p = jnp.float32(1.0 / P)
    m_col = jnp.concatenate(
        [jnp.sum(t, axis=1, keepdims=True) for t in (x1, y1, y2, y3)],
        axis=0) * inv_p                                        # (4*C_, 1)

    # cv2 on the pooled means: broadcast-multiply + sublane reduce
    # (avoids a degenerate N=1 matmul):  avg[o] = sum_k w2[k, o] * m[k] + b2[o].
    avg = jnp.sum(w2_ref[...] * m_col, axis=0, keepdims=True) + b2_ref[...]  # (1, C2)

    # ---- SE gate: Linear -> ReLU -> Linear -> Sigmoid (bias-free) --------------
    h = jnp.maximum(jnp.sum(fc1t_ref[...] * avg, axis=1, keepdims=True), 0.0)  # (Cr, 1)
    s = jax.nn.sigmoid(jnp.sum(fc2_ref[...] * h, axis=0, keepdims=True))       # (1, C2)

    s_ref[...] = s.astype(s_ref.dtype)


def sppfa_pallas(x_nchw, params):
    """x_nchw: (B, C1, H, W); params in (in, out) convention (see __main__)."""
    w1, b1, w2, b2, fc1, fc2 = params
    B, C1, H, W = x_nchw.shape
    C_ = w1.shape[1]
    C2 = w2.shape[1]
    Cr = fc1.shape[1]
    P = H * W
    assert C2 == C1, "SPPFA's final view(b, c, 1, 1) requires c2 == c1"
    assert H >= 3 and W >= 3

    # Free row-major view of the NCHW input -- NO transpose, no extra HBM pass.
    x_flat = x_nchw.reshape(B, C1, P)

    # Tiny one-time weight relayouts so the kernel needs no in-kernel transposes.
    w1t = jnp.transpose(w1)            # (C_, C1)
    b1c = jnp.reshape(b1, (C_, 1))     # (C_, 1)
    fc1t = jnp.transpose(fc1)          # (Cr, C2)

    kernel = functools.partial(_sppfa_kernel, H=H, W=W)

    s = pl.pallas_call(
        kernel,
        out_shape=jax.ShapeDtypeStruct((B, 1, C2), jnp.float32),
        grid=(B,),                                             # one image per step
        in_specs=[
            pl.BlockSpec((None, C1, P), lambda b: (b, 0, 0)),  # x (per image)
            pl.BlockSpec((C_, C1), lambda b: (0, 0)),          # cv1 weight^T
            pl.BlockSpec((C_, 1), lambda b: (0, 0)),           # cv1 bias
            pl.BlockSpec((4 * C_, C2), lambda b: (0, 0)),      # cv2 weight
            pl.BlockSpec((1, C2), lambda b: (0, 0)),           # cv2 bias
            pl.BlockSpec((Cr, C2), lambda b: (0, 0)),          # fc1^T
            pl.BlockSpec((Cr, C2), lambda b: (0, 0)),          # fc2
        ],
        out_specs=pl.BlockSpec((None, 1, C2), lambda b: (b, 0, 0)),
        compiler_params=pltpu.CompilerParams(
            dimension_semantics=("parallel",)),                # both TCs busy on v7x
    )(x_flat, w1t, b1c, w2, b2, fc1t, fc2)

    # Channel-wise SE rescale applied in XLA on the ORIGINAL NCHW tensor
    # (no full-size kernel output, no output transpose).
    return x_nchw * s.reshape(B, C2, 1, 1)


def sppfa_reference(x, params):
    """Pure-JAX reference matching the PyTorch forward (NCHW)."""
    w1, b1, w2, b2, fc1, fc2 = params

    def mp(t):
        return jax.lax.reduce_window(
            t, -jnp.inf, jax.lax.max,
            window_dimensions=(1, 1, 5, 5), window_strides=(1, 1, 1, 1),
            padding=[(0, 0), (0, 0), (2, 2), (2, 2)])

    x1 = jnp.einsum('bchw,cd->bdhw', x, w1) + b1.reshape(1, -1, 1, 1)
    y1 = mp(x1)
    y2 = mp(y1)
    y3 = mp(y2)
    cat = jnp.concatenate([x1, y1, y2, y3], axis=1)
    out = jnp.einsum('bchw,cd->bdhw', cat, w2) + b2.reshape(1, -1, 1, 1)
    avg = out.mean(axis=(2, 3))                      # (B, C2)
    h = jnp.maximum(avg @ fc1, 0.0)
    s = jax.nn.sigmoid(h @ fc2)                      # (B, C2)
    return x * s[:, :, None, None]


if __name__ == "__main__":
    # Module hyperparameters: c1 = c2 = 32, k = 5, reduction = 16
    B, C1, H, W = 2, 32, 16, 16
    C2 = C1
    C_ = C1 // 2
    Cr = C2 // 16

    key = jax.random.PRNGKey(0)
    kx, k1, kb1, k2, kb2, kf1, kf2 = jax.random.split(key, 7)

    x = jax.random.normal(kx, (B, C1, H, W), dtype=jnp.float32)

    # Deterministic synthetic parameters (conv 1x1 weights stored as (Cin, Cout),
    # fc weights stored as (in, out), i.e. transposed w.r.t. torch.nn conventions).
    w1 = jax.random.normal(k1, (C1, C_), dtype=jnp.float32) * 0.1
    b1 = jax.random.normal(kb1, (1, C_), dtype=jnp.float32) * 0.1
    w2 = jax.random.normal(k2, (4 * C_, C2), dtype=jnp.float32) * 0.1
    b2 = jax.random.normal(kb2, (1, C2), dtype=jnp.float32) * 0.1
    fc1 = jax.random.normal(kf1, (C2, Cr), dtype=jnp.float32) * 0.1
    fc2 = jax.random.normal(kf2, (Cr, C2), dtype=jnp.float32) * 0.1

    params = (w1, b1, w2, b2, fc1, fc2)

    out = jax.block_until_ready(sppfa_pallas(x, params))
    ref = jax.block_until_ready(sppfa_reference(x, params))
    np.testing.assert_allclose(np.asarray(out), np.asarray(ref),
                               rtol=1e-4, atol=1e-4)

    print("KERNEL_OK")
</pallas_src>

<mosaic_0001>
module attributes {stable_mosaic.version = 11 : i64} {
  func.func @_sppfa_kernel(%arg0: i32, %arg1: memref<1x32x256xf32, #tpu.memory_space<vmem>>, %arg2: memref<16x32xf32, #tpu.memory_space<vmem>>, %arg3: memref<16x1xf32, #tpu.memory_space<vmem>>, %arg4: memref<64x32xf32, #tpu.memory_space<vmem>>, %arg5: memref<1x32xf32, #tpu.memory_space<vmem>>, %arg6: memref<2x32xf32, #tpu.memory_space<vmem>>, %arg7: memref<2x32xf32, #tpu.memory_space<vmem>>, %arg8: memref<1x1x32xf32, #tpu.memory_space<vmem>>) attributes {dimension_semantics = [#tpu.dimension_semantics<parallel>], iteration_bounds = array<i64: 2>, scalar_prefetch = 0 : i64, scratch_operands = 0 : i64, tpu.core_type = #tpu.core_type<tc>, window_params = [{transform_indices = @transform_0, window_bounds = array<i64: 1, 32, 256>}, {pipeline_mode = #tpu.pipeline_mode<synchronous>, transform_indices = @transform_1, window_bounds = array<i64: 16, 32>}, {pipeline_mode = #tpu.pipeline_mode<synchronous>, transform_indices = @transform_2, window_bounds = array<i64: 16, 1>}, {pipeline_mode = #tpu.pipeline_mode<synchronous>, transform_indices = @transform_3, window_bounds = array<i64: 64, 32>}, {pipeline_mode = #tpu.pipeline_mode<synchronous>, transform_indices = @transform_4, window_bounds = array<i64: 1, 32>}, {pipeline_mode = #tpu.pipeline_mode<synchronous>, transform_indices = @transform_5, window_bounds = array<i64: 2, 32>}, {pipeline_mode = #tpu.pipeline_mode<synchronous>, transform_indices = @transform_6, window_bounds = array<i64: 2, 32>}, {transform_indices = @transform_7, window_bounds = array<i64: 1, 1, 32>}]} {
    %c0 = arith.constant 0 : index
    %c0_0 = arith.constant 0 : index
    %0 = vector.load %arg2[%c0, %c0_0] : memref<16x32xf32, #tpu.memory_space<vmem>>, vector<16x32xf32>
    %c0_1 = arith.constant 0 : index
    %c0_2 = arith.constant 0 : index
    %c0_3 = arith.constant 0 : index
    %1 = vector.load %arg1[%c0_1, %c0_2, %c0_3] : memref<1x32x256xf32, #tpu.memory_space<vmem>>, vector<1x32x256xf32>
    %2 = vector.shape_cast %1 : vector<1x32x256xf32> to vector<32x256xf32>
    %cst = arith.constant dense<0.000000e+00> : vector<16x256xf32>
    %3 = tpu.matmul %0, %2, %cst {dimension_numbers = #tpu.dot_dimension_numbers<[1], [0], [0], [1], [0, 0, 1, 1], [], []>} : vector<16x32xf32>, vector<32x256xf32>, vector<16x256xf32> -> vector<16x256xf32>
    %c0_4 = arith.constant 0 : index
    %c0_5 = arith.constant 0 : index
    %4 = vector.load %arg3[%c0_4, %c0_5] : memref<16x1xf32, #tpu.memory_space<vmem>>, vector<16x1xf32>
    %5 = vector.broadcast %4 : vector<16x1xf32> to vector<16x256xf32>
    %6 = arith.addf %3, %5 : vector<16x256xf32>
    %7 = tpu.iota {dimensions = array<i32: 1>} : vector<16x256xi32>
    %c15_i32 = arith.constant 15 : i32
    %8 = vector.broadcast %c15_i32 : i32 to vector<16x256xi32>
    %9 = arith.andi %7, %8 : vector<16x256xi32>
    %c15_i32_6 = arith.constant 15 : i32
    %10 = vector.broadcast %c15_i32_6 : i32 to vector<16x256xi32>
    %11 = arith.cmpi slt, %9, %10 : vector<16x256xi32>
    %c14_i32 = arith.constant 14 : i32
    %12 = vector.broadcast %c14_i32 : i32 to vector<16x256xi32>
    %13 = arith.cmpi slt, %9, %12 : vector<16x256xi32>
    %c1_i32 = arith.constant 1 : i32
    %14 = vector.broadcast %c1_i32 : i32 to vector<16x256xi32>
    %15 = arith.cmpi sge, %9, %14 : vector<16x256xi32>
    %c2_i32 = arith.constant 2 : i32
    %16 = vector.broadcast %c2_i32 : i32 to vector<16x256xi32>
    %17 = arith.cmpi sge, %9, %16 : vector<16x256xi32>
    %18 = vector.extract_strided_slice %6 {offsets = [0, 1], sizes = [16, 255], strides = [1, 1]} : vector<16x256xf32> to vector<16x255xf32>
    %cst_7 = arith.constant 0xFF800000 : f32
    %19 = vector.broadcast %cst_7 : f32 to vector<16x1xf32>
    %20 = tpu.concatenate %18, %19 in 1 : vector<16x255xf32>, vector<16x1xf32> -> vector<16x256xf32>
    %cst_8 = arith.constant 0xFF800000 : f32
    %21 = vector.broadcast %cst_8 : f32 to vector<16x256xf32>
    %22 = arith.select %11, %20, %21 : vector<16x256xi1>, vector<16x256xf32>
    %23 = arith.maximumf %6, %22 : vector<16x256xf32>
    %24 = vector.extract_strided_slice %6 {offsets = [0, 2], sizes = [16, 254], strides = [1, 1]} : vector<16x256xf32> to vector<16x254xf32>
    %cst_9 = arith.constant 0xFF800000 : f32
    %25 = vector.broadcast %cst_9 : f32 to vector<16x2xf32>
    %26 = tpu.concatenate %24, %25 in 1 : vector<16x254xf32>, vector<16x2xf32> -> vector<16x256xf32>
    %cst_10 = arith.constant 0xFF800000 : f32
    %27 = vector.broadcast %cst_10 : f32 to vector<16x256xf32>
    %28 = arith.select %13, %26, %27 : vector<16x256xi1>, vector<16x256xf32>
    %29 = arith.maximumf %23, %28 : vector<16x256xf32>
    %cst_11 = arith.constant 0xFF800000 : f32
    %30 = vector.broadcast %cst_11 : f32 to vector<16x1xf32>
    %31 = vector.extract_strided_slice %6 {offsets = [0, 0], sizes = [16, 255], strides = [1, 1]} : vector<16x256xf32> to vector<16x255xf32>
    %32 = tpu.concatenate %30, %31 in 1 : vector<16x1xf32>, vector<16x255xf32> -> vector<16x256xf32>
    %cst_12 = arith.constant 0xFF800000 : f32
    %33 = vector.broadcast %cst_12 : f32 to vector<16x256xf32>
    %34 = arith.select %15, %32, %33 : vector<16x256xi1>, vector<16x256xf32>
    %35 = arith.maximumf %29, %34 : vector<16x256xf32>
    %cst_13 = arith.constant 0xFF800000 : f32
    %36 = vector.broadcast %cst_13 : f32 to vector<16x2xf32>
    %37 = vector.extract_strided_slice %6 {offsets = [0, 0], sizes = [16, 254], strides = [1, 1]} : vector<16x256xf32> to vector<16x254xf32>
    %38 = tpu.concatenate %36, %37 in 1 : vector<16x2xf32>, vector<16x254xf32> -> vector<16x256xf32>
    %cst_14 = arith.constant 0xFF800000 : f32
    %39 = vector.broadcast %cst_14 : f32 to vector<16x256xf32>
    %40 = arith.select %17, %38, %39 : vector<16x256xi1>, vector<16x256xf32>
    %41 = arith.maximumf %35, %40 : vector<16x256xf32>
    %42 = vector.extract_strided_slice %41 {offsets = [0, 16], sizes = [16, 240], strides = [1, 1]} : vector<16x256xf32> to vector<16x240xf32>
    %cst_15 = arith.constant 0xFF800000 : f32
    %43 = vector.broadcast %cst_15 : f32 to vector<16x16xf32>
    %44 = tpu.concatenate %42, %43 in 1 : vector<16x240xf32>, vector<16x16xf32> -> vector<16x256xf32>
    %45 = arith.maximumf %41, %44 : vector<16x256xf32>
    %46 = vector.extract_strided_slice %41 {offsets = [0, 32], sizes = [16, 224], strides = [1, 1]} : vector<16x256xf32> to vector<16x224xf32>
    %cst_16 = arith.constant 0xFF800000 : f32
    %47 = vector.broadcast %cst_16 : f32 to vector<16x32xf32>
    %48 = tpu.concatenate %46, %47 in 1 : vector<16x224xf32>, vector<16x32xf32> -> vector<16x256xf32>
    %49 = arith.maximumf %45, %48 : vector<16x256xf32>
    %cst_17 = arith.constant 0xFF800000 : f32
    %50 = vector.broadcast %cst_17 : f32 to vector<16x16xf32>
    %51 = vector.extract_strided_slice %41 {offsets = [0, 0], sizes = [16, 240], strides = [1, 1]} : vector<16x256xf32> to vector<16x240xf32>
    %52 = tpu.concatenate %50, %51 in 1 : vector<16x16xf32>, vector<16x240xf32> -> vector<16x256xf32>
    %53 = arith.maximumf %49, %52 : vector<16x256xf32>
    %cst_18 = arith.constant 0xFF800000 : f32
    %54 = vector.broadcast %cst_18 : f32 to vector<16x32xf32>
    %55 = vector.extract_strided_slice %41 {offsets = [0, 0], sizes = [16, 224], strides = [1, 1]} : vector<16x256xf32> to vector<16x224xf32>
    %56 = tpu.concatenate %54, %55 in 1 : vector<16x32xf32>, vector<16x224xf32> -> vector<16x256xf32>
    %57 = arith.maximumf %53, %56 : vector<16x256xf32>
    %58 = vector.extract_strided_slice %57 {offsets = [0, 1], sizes = [16, 255], strides = [1, 1]} : vector<16x256xf32> to vector<16x255xf32>
    %cst_19 = arith.constant 0xFF800000 : f32
    %59 = vector.broadcast %cst_19 : f32 to vector<16x1xf32>
    %60 = tpu.concatenate %58, %59 in 1 : vector<16x255xf32>, vector<16x1xf32> -> vector<16x256xf32>
    %cst_20 = arith.constant 0xFF800000 : f32
    %61 = vector.broadcast %cst_20 : f32 to vector<16x256xf32>
    %62 = arith.select %11, %60, %61 : vector<16x256xi1>, vector<16x256xf32>
    %63 = arith.maximumf %57, %62 : vector<16x256xf32>
    %64 = vector.extract_strided_slice %57 {offsets = [0, 2], sizes = [16, 254], strides = [1, 1]} : vector<16x256xf32> to vector<16x254xf32>
    %cst_21 = arith.constant 0xFF800000 : f32
    %65 = vector.broadcast %cst_21 : f32 to vector<16x2xf32>
    %66 = tpu.concatenate %64, %65 in 1 : vector<16x254xf32>, vector<16x2xf32> -> vector<16x256xf32>
    %cst_22 = arith.constant 0xFF800000 : f32
    %67 = vector.broadcast %cst_22 : f32 to vector<16x256xf32>
    %68 = arith.select %13, %66, %67 : vector<16x256xi1>, vector<16x256xf32>
    %69 = arith.maximumf %63, %68 : vector<16x256xf32>
    %cst_23 = arith.constant 0xFF800000 : f32
    %70 = vector.broadcast %cst_23 : f32 to vector<16x1xf32>
    %71 = vector.extract_strided_slice %57 {offsets = [0, 0], sizes = [16, 255], strides = [1, 1]} : vector<16x256xf32> to vector<16x255xf32>
    %72 = tpu.concatenate %70, %71 in 1 : vector<16x1xf32>, vector<16x255xf32> -> vector<16x256xf32>
    %cst_24 = arith.constant 0xFF800000 : f32
    %73 = vector.broadcast %cst_24 : f32 to vector<16x256xf32>
    %74 = arith.select %15, %72, %73 : vector<16x256xi1>, vector<16x256xf32>
    %75 = arith.maximumf %69, %74 : vector<16x256xf32>
    %cst_25 = arith.constant 0xFF800000 : f32
    %76 = vector.broadcast %cst_25 : f32 to vector<16x2xf32>
    %77 = vector.extract_strided_slice %57 {offsets = [0, 0], sizes = [16, 254], strides = [1, 1]} : vector<16x256xf32> to vector<16x254xf32>
    %78 = tpu.concatenate %76, %77 in 1 : vector<16x2xf32>, vector<16x254xf32> -> vector<16x256xf32>
    %cst_26 = arith.constant 0xFF800000 : f32
    %79 = vector.broadcast %cst_26 : f32 to vector<16x256xf32>
    %80 = arith.select %17, %78, %79 : vector<16x256xi1>, vector<16x256xf32>
    %81 = arith.maximumf %75, %80 : vector<16x256xf32>
    %82 = vector.extract_strided_slice %81 {offsets = [0, 16], sizes = [16, 240], strides = [1, 1]} : vector<16x256xf32> to vector<16x240xf32>
    %cst_27 = arith.constant 0xFF800000 : f32
    %83 = vector.broadcast %cst_27 : f32 to vector<16x16xf32>
    %84 = tpu.concatenate %82, %83 in 1 : vector<16x240xf32>, vector<16x16xf32> -> vector<16x256xf32>
    %85 = arith.maximumf %81, %84 : vector<16x256xf32>
    %86 = vector.extract_strided_slice %81 {offsets = [0, 32], sizes = [16, 224], strides = [1, 1]} : vector<16x256xf32> to vector<16x224xf32>
    %cst_28 = arith.constant 0xFF800000 : f32
    %87 = vector.broadcast %cst_28 : f32 to vector<16x32xf32>
    %88 = tpu.concatenate %86, %87 in 1 : vector<16x224xf32>, vector<16x32xf32> -> vector<16x256xf32>
    %89 = arith.maximumf %85, %88 : vector<16x256xf32>
    %cst_29 = arith.constant 0xFF800000 : f32
    %90 = vector.broadcast %cst_29 : f32 to vector<16x16xf32>
    %91 = vector.extract_strided_slice %81 {offsets = [0, 0], sizes = [16, 240], strides = [1, 1]} : vector<16x256xf32> to vector<16x240xf32>
    %92 = tpu.concatenate %90, %91 in 1 : vector<16x16xf32>, vector<16x240xf32> -> vector<16x256xf32>
    %93 = arith.maximumf %89, %92 : vector<16x256xf32>
    %cst_30 = arith.constant 0xFF800000 : f32
    %94 = vector.broadcast %cst_30 : f32 to vector<16x32xf32>
    %95 = vector.extract_strided_slice %81 {offsets = [0, 0], sizes = [16, 224], strides = [1, 1]} : vector<16x256xf32> to vector<16x224xf32>
    %96 = tpu.concatenate %94, %95 in 1 : vector<16x32xf32>, vector<16x224xf32> -> vector<16x256xf32>
    %97 = arith.maximumf %93, %96 : vector<16x256xf32>
    %98 = vector.extract_strided_slice %97 {offsets = [0, 1], sizes = [16, 255], strides = [1, 1]} : vector<16x256xf32> to vector<16x255xf32>
    %cst_31 = arith.constant 0xFF800000 : f32
    %99 = vector.broadcast %cst_31 : f32 to vector<16x1xf32>
    %100 = tpu.concatenate %98, %99 in 1 : vector<16x255xf32>, vector<16x1xf32> -> vector<16x256xf32>
    %cst_32 = arith.constant 0xFF800000 : f32
    %101 = vector.broadcast %cst_32 : f32 to vector<16x256xf32>
    %102 = arith.select %11, %100, %101 : vector<16x256xi1>, vector<16x256xf32>
    %103 = arith.maximumf %97, %102 : vector<16x256xf32>
    %104 = vector.extract_strided_slice %97 {offsets = [0, 2], sizes = [16, 254], strides = [1, 1]} : vector<16x256xf32> to vector<16x254xf32>
    %cst_33 = arith.constant 0xFF800000 : f32
    %105 = vector.broadcast %cst_33 : f32 to vector<16x2xf32>
    %106 = tpu.concatenate %104, %105 in 1 : vector<16x254xf32>, vector<16x2xf32> -> vector<16x256xf32>
    %cst_34 = arith.constant 0xFF800000 : f32
    %107 = vector.broadcast %cst_34 : f32 to vector<16x256xf32>
    %108 = arith.select %13, %106, %107 : vector<16x256xi1>, vector<16x256xf32>
    %109 = arith.maximumf %103, %108 : vector<16x256xf32>
    %cst_35 = arith.constant 0xFF800000 : f32
    %110 = vector.broadcast %cst_35 : f32 to vector<16x1xf32>
    %111 = vector.extract_strided_slice %97 {offsets = [0, 0], sizes = [16, 255], strides = [1, 1]} : vector<16x256xf32> to vector<16x255xf32>
    %112 = tpu.concatenate %110, %111 in 1 : vector<16x1xf32>, vector<16x255xf32> -> vector<16x256xf32>
    %cst_36 = arith.constant 0xFF800000 : f32
    %113 = vector.broadcast %cst_36 : f32 to vector<16x256xf32>
    %114 = arith.select %15, %112, %113 : vector<16x256xi1>, vector<16x256xf32>
    %115 = arith.maximumf %109, %114 : vector<16x256xf32>
    %cst_37 = arith.constant 0xFF800000 : f32
    %116 = vector.broadcast %cst_37 : f32 to vector<16x2xf32>
    %117 = vector.extract_strided_slice %97 {offsets = [0, 0], sizes = [16, 254], strides = [1, 1]} : vector<16x256xf32> to vector<16x254xf32>
    %118 = tpu.concatenate %116, %117 in 1 : vector<16x2xf32>, vector<16x254xf32> -> vector<16x256xf32>
    %cst_38 = arith.constant 0xFF800000 : f32
    %119 = vector.broadcast %cst_38 : f32 to vector<16x256xf32>
    %120 = arith.select %17, %118, %119 : vector<16x256xi1>, vector<16x256xf32>
    %121 = arith.maximumf %115, %120 : vector<16x256xf32>
    %122 = vector.extract_strided_slice %121 {offsets = [0, 16], sizes = [16, 240], strides = [1, 1]} : vector<16x256xf32> to vector<16x240xf32>
    %cst_39 = arith.constant 0xFF800000 : f32
    %123 = vector.broadcast %cst_39 : f32 to vector<16x16xf32>
    %124 = tpu.concatenate %122, %123 in 1 : vector<16x240xf32>, vector<16x16xf32> -> vector<16x256xf32>
    %125 = arith.maximumf %121, %124 : vector<16x256xf32>
    %126 = vector.extract_strided_slice %121 {offsets = [0, 32], sizes = [16, 224], strides = [1, 1]} : vector<16x256xf32> to vector<16x224xf32>
    %cst_40 = arith.constant 0xFF800000 : f32
    %127 = vector.broadcast %cst_40 : f32 to vector<16x32xf32>
    %128 = tpu.concatenate %126, %127 in 1 : vector<16x224xf32>, vector<16x32xf32> -> vector<16x256xf32>
    %129 = arith.maximumf %125, %128 : vector<16x256xf32>
    %cst_41 = arith.constant 0xFF800000 : f32
    %130 = vector.broadcast %cst_41 : f32 to vector<16x16xf32>
    %131 = vector.extract_strided_slice %121 {offsets = [0, 0], sizes = [16, 240], strides = [1, 1]} : vector<16x256xf32> to vector<16x240xf32>
    %132 = tpu.concatenate %130, %131 in 1 : vector<16x16xf32>, vector<16x240xf32> -> vector<16x256xf32>
    %133 = arith.maximumf %129, %132 : vector<16x256xf32>
    %cst_42 = arith.constant 0xFF800000 : f32
    %134 = vector.broadcast %cst_42 : f32 to vector<16x32xf32>
    %135 = vector.extract_strided_slice %121 {offsets = [0, 0], sizes = [16, 224], strides = [1, 1]} : vector<16x256xf32> to vector<16x224xf32>
    %136 = tpu.concatenate %134, %135 in 1 : vector<16x32xf32>, vector<16x224xf32> -> vector<16x256xf32>
    %137 = arith.maximumf %133, %136 : vector<16x256xf32>
    %cst_43 = arith.constant dense<0.000000e+00> : vector<16xf32>
    %138 = vector.multi_reduction <add>, %6, %cst_43 [1] : vector<16x256xf32> to vector<16xf32>
    %139 = vector.shape_cast %138 : vector<16xf32> to vector<16x1xf32>
    %cst_44 = arith.constant dense<0.000000e+00> : vector<16xf32>
    %140 = vector.multi_reduction <add>, %57, %cst_44 [1] : vector<16x256xf32> to vector<16xf32>
    %141 = vector.shape_cast %140 : vector<16xf32> to vector<16x1xf32>
    %cst_45 = arith.constant dense<0.000000e+00> : vector<16xf32>
    %142 = vector.multi_reduction <add>, %97, %cst_45 [1] : vector<16x256xf32> to vector<16xf32>
    %143 = vector.shape_cast %142 : vector<16xf32> to vector<16x1xf32>
    %cst_46 = arith.constant dense<0.000000e+00> : vector<16xf32>
    %144 = vector.multi_reduction <add>, %137, %cst_46 [1] : vector<16x256xf32> to vector<16xf32>
    %145 = vector.shape_cast %144 : vector<16xf32> to vector<16x1xf32>
    %146 = tpu.concatenate %139, %141, %143, %145 in 0 : vector<16x1xf32>, vector<16x1xf32>, vector<16x1xf32>, vector<16x1xf32> -> vector<64x1xf32>
    %cst_47 = arith.constant 3.906250e-03 : f32
    %147 = vector.broadcast %cst_47 : f32 to vector<64x1xf32>
    %148 = arith.mulf %146, %147 : vector<64x1xf32>
    %c0_48 = arith.constant 0 : index
    %c0_49 = arith.constant 0 : index
    %149 = vector.load %arg4[%c0_48, %c0_49] : memref<64x32xf32, #tpu.memory_space<vmem>>, vector<64x32xf32>
    %150 = vector.broadcast %148 : vector<64x1xf32> to vector<64x32xf32>
    %151 = arith.mulf %149, %150 : vector<64x32xf32>
    %cst_50 = arith.constant dense<0.000000e+00> : vector<32xf32>
    %152 = vector.multi_reduction <add>, %151, %cst_50 [0] : vector<64x32xf32> to vector<32xf32>
    %153 = vector.shape_cast %152 : vector<32xf32> to vector<1x32xf32>
    %c0_51 = arith.constant 0 : index
    %c0_52 = arith.constant 0 : index
    %154 = vector.load %arg5[%c0_51, %c0_52] : memref<1x32xf32, #tpu.memory_space<vmem>>, vector<1x32xf32>
    %155 = arith.addf %153, %154 : vector<1x32xf32>
    %c0_53 = arith.constant 0 : index
    %c0_54 = arith.constant 0 : index
    %156 = vector.load %arg6[%c0_53, %c0_54] : memref<2x32xf32, #tpu.memory_space<vmem>>, vector<2x32xf32>
    %157 = vector.broadcast %155 : vector<1x32xf32> to vector<2x32xf32>
    %158 = arith.mulf %156, %157 : vector<2x32xf32>
    %cst_55 = arith.constant dense<0.000000e+00> : vector<2xf32>
    %159 = vector.multi_reduction <add>, %158, %cst_55 [1] : vector<2x32xf32> to vector<2xf32>
    %160 = vector.shape_cast %159 : vector<2xf32> to vector<2x1xf32>
    %cst_56 = arith.constant 0.000000e+00 : f32
    %161 = vector.broadcast %cst_56 : f32 to vector<2x1xf32>
    %162 = arith.maximumf %160, %161 : vector<2x1xf32>
    %c0_57 = arith.constant 0 : index
    %c0_58 = arith.constant 0 : index
    %163 = vector.load %arg7[%c0_57, %c0_58] : memref<2x32xf32, #tpu.memory_space<vmem>>, vector<2x32xf32>
    %164 = vector.broadcast %162 : vector<2x1xf32> to vector<2x32xf32>
    %165 = arith.mulf %163, %164 : vector<2x32xf32>
    %cst_59 = arith.constant dense<0.000000e+00> : vector<32xf32>
    %166 = vector.multi_reduction <add>, %165, %cst_59 [0] : vector<2x32xf32> to vector<32xf32>
    %167 = vector.shape_cast %166 : vector<32xf32> to vector<1x32xf32>
    %168 = arith.negf %167 : vector<1x32xf32>
    %169 = math.exp %168 : vector<1x32xf32>
    %cst_60 = arith.constant 1.000000e+00 : f32
    %170 = vector.broadcast %cst_60 : f32 to vector<1x32xf32>
    %171 = arith.addf %170, %169 : vector<1x32xf32>
    %172 = arith.divf %170, %171 : vector<1x32xf32>
    %c0_61 = arith.constant 0 : index
    %c0_62 = arith.constant 0 : index
    %c0_63 = arith.constant 0 : index
    %173 = vector.load %arg8[%c0_61, %c0_62, %c0_63] : memref<1x1x32xf32, #tpu.memory_space<vmem>>, vector<1x1x32xf32>
    %174 = vector.shape_cast %173 : vector<1x1x32xf32> to vector<1x32xf32>
    %175 = vector.shape_cast %172 : vector<1x32xf32> to vector<1x1x32xf32>
    tpu.vector_store %arg8[%c0_61, %c0_62, %c0_63], %175 {strides = array<i32>} : memref<1x1x32xf32, #tpu.memory_space<vmem>>, vector<1x1x32xf32>,
    return
  }
  func.func @transform_0(%arg0: i32) -> (i32, i32, i32) {
    %c0_i32 = arith.constant 0 : i32
    %c0_i32_0 = arith.constant 0 : i32
    %c0_i32_1 = arith.constant 0 : i32
    return %arg0, %c0_i32, %c0_i32_0 : i32, i32, i32
  }
  func.func @transform_1(%arg0: i32) -> (i32, i32) {
    %c0_i32 = arith.constant 0 : i32
    %c0_i32_0 = arith.constant 0 : i32
    %c0_i32_1 = arith.constant 0 : i32
    return %c0_i32, %c0_i32_0 : i32, i32
  }
  func.func @transform_2(%arg0: i32) -> (i32, i32) {
    %c0_i32 = arith.constant 0 : i32
    %c0_i32_0 = arith.constant 0 : i32
    %c0_i32_1 = arith.constant 0 : i32
    return %c0_i32, %c0_i32_0 : i32, i32
  }
  func.func @transform_3(%arg0: i32) -> (i32, i32) {
    %c0_i32 = arith.constant 0 : i32
    %c0_i32_0 = arith.constant 0 : i32
    %c0_i32_1 = arith.constant 0 : i32
    return %c0_i32, %c0_i32_0 : i32, i32
  }
  func.func @transform_4(%arg0: i32) -> (i32, i32) {
    %c0_i32 = arith.constant 0 : i32
    %c0_i32_0 = arith.constant 0 : i32
    %c0_i32_1 = arith.constant 0 : i32
    return %c0_i32, %c0_i32_0 : i32, i32
  }
  func.func @transform_5(%arg0: i32) -> (i32, i32) {
    %c0_i32 = arith.constant 0 : i32
    %c0_i32_0 = arith.constant 0 : i32
    %c0_i32_1 = arith.constant 0 : i32
    return %c0_i32, %c0_i32_0 : i32, i32
  }
  func.func @transform_6(%arg0: i32) -> (i32, i32) {
    %c0_i32 = arith.constant 0 : i32
    %c0_i32_0 = arith.constant 0 : i32
    %c0_i32_1 = arith.constant 0 : i32
    return %c0_i32, %c0_i32_0 : i32, i32
  }
  func.func @transform_7(%arg0: i32) -> (i32, i32, i32) {
    %c0_i32 = arith.constant 0 : i32
    %c0_i32_0 = arith.constant 0 : i32
    %c0_i32_1 = arith.constant 0 : i32
    return %arg0, %c0_i32, %c0_i32_0 : i32, i32, i32
  }
}

</mosaic_0001>

<llo_original>
// kernel: tpu_custom_call.1
$region0: #{tpu_custom_call.1}
  #allocation0 [shape = 'u32[]', space=smem, size = 0x4, offset = 0x4, fixed_abs, tag = 'smem constant byte address 0x4 - core index']
  #allocation1 [shape = 'u32[144,128]{1,0:T(1,128)}', space=vmem, size = 0x12000, scoped, tag = 'internal scratch']
  %s0 = inlined_call_operand.hbm [shape: f32[2,32,256], index: 0, kind: input, shape index: {}]
  %s1 = inlined_call_operand.vmem [shape: f32[16,32], index: 1, kind: input, shape index: {}]
  %s2 = inlined_call_operand.vmem [shape: f32[16,1], index: 2, kind: input, shape index: {}]
  %s3 = inlined_call_operand.vmem [shape: f32[64,32], index: 3, kind: input, shape index: {}]
  %s4 = inlined_call_operand.vmem [shape: f32[1,32], index: 4, kind: input, shape index: {}]
  %s5 = inlined_call_operand.vmem [shape: f32[2,32], index: 5, kind: input, shape index: {}]
  %s6 = inlined_call_operand.vmem [shape: f32[2,32], index: 6, kind: input, shape index: {}]
  %s7 = inlined_call_operand.hbm [shape: f32[2,1,32], index: 7, kind: output, shape index: {}]
  %s8 = sld [smem:[#allocation0]]
  $region65: #{tpu_custom_call.1} parent=0
    _
  %s10 = ssub.s32 1, %s8
  %s11 = scalar_select 0, %s10, %s8
  $region1: #{tpu_custom_call.1} parent=0
    #allocation2 [shape = 'u8[65536]{0}', space=vmem, size = 0x10000, scoped, tag = 'input window, operand 0']
    #allocation3 [shape = 's32[2]{0}', space=sflag, size = 0x8, scoped, tag = 'scoped memory for tpu_custom_call.1']
    #allocation4 [shape = 's32[2]{0}', space=sflag, size = 0x8, scoped, tag = 'scoped memory for tpu_custom_call.1']
    #allocation5 [shape = 'u8[1024]{0}', space=vmem, size = 0x400, scoped, tag = 'output window, operand 0']
    %12 = vsyncpa [#allocation3], 0
    %s13 = scalar_lea.sflag [#allocation3], 1
    %14 = vsyncpa %s13, 0
    %15 = vsyncpa [#allocation4], 0
    %s16 = scalar_lea.sflag [#allocation4], 1
    %17 = vsyncpa %s16, 0
    loop: start=0, step=1, limit=4
    $region2: #{tpu_custom_call.1} parent=1 // loop_pre_header
      _
    $region3: #{tpu_custom_call.1} parent=1 // loop_header
      %s19 = sphi 0, %s23
      %p20 = scmp.ge.s32.totalorder %s19, 4
      %s29 = sphi 0, %s31
      %s32 = sphi 0, %s29
      %s33 = sphi 0, %s32
      %s49 = sphi 0, %s33
      %s53 = sphi 0, %s53
      %s55 = sphi 0, %s53
      %s56 = sphi 0, %s55
      %s70 = sphi 0, %s56
      %s74 = sphi 0, %s74
      %s76 = sphi 0, %s74
      %s77 = sphi 0, %s76
      %s91 = sphi 0, %s77
      %s95 = sphi 0, %s95
      %s97 = sphi 0, %s95
      %s98 = sphi 0, %s97
      %s112 = sphi 0, %s98
      %s116 = sphi 0, %s116
      %s118 = sphi 0, %s116
      %s119 = sphi 0, %s118
      %s133 = sphi 0, %s119
      %s137 = sphi 0, %s137
      %s139 = sphi 0, %s137
      %s140 = sphi 0, %s139
      %s154 = sphi 0, %s140
      %s158 = sphi 0, %s158
      %s160 = sphi 0, %s158
      %s161 = sphi 0, %s160
      %s175 = sphi 0, %s161
      %s181 = sphi 0, %s183
      %s184 = sphi 0, %s181
      %s185 = sphi 0, %s184
      %s201 = sphi 0, %s185
    $region4: #{tpu_custom_call.1} parent=1 // loop_header_branch
      %22 = sbr.rel (%p20) target = $region8
    $region5: #{tpu_custom_call.1} parent=1 // loop_body
      %s24 = ssub.s32 %s19, 1
      %s25 = ssub.s32 %s19, 2
      %s26 = sadd.s32 %s19, 1
      %s27 = ssub.s32 %s19, %s26
      %p28 = scmp.eq.s32.totalorder %s27, 0
      %s30 = sadd.s32 %s29, 1
      %s31 = scalar_select %p28, %s29, %s30
      %p34 = pneg %p28
      %p35 = scmp.eq.s32.totalorder %s19, 1
      %p36 = por %p34, %p35
      %p37 = scmp.ne.s32.totalorder %s29, %s32
      %p38 = scmp.eq.s32.totalorder %s19, 0
      %p39 = por %p37, %p38
      %p40 = scmp.ne.s32.totalorder %s29, %s32
      %p41 = scmp.eq.s32.totalorder %s24, 1
      %p42 = por %p40, %p41
      %p43 = scmp.ne.s32.totalorder %s32, %s33
      %p44 = scmp.eq.s32.totalorder %s24, 0
      %p45 = por %p43, %p44
      %p46 = scmp.ne.s32.totalorder %s32, %s33
      %p47 = scmp.eq.s32.totalorder %s25, 1
      %p48 = por %p46, %p47
      %p50 = scmp.ne.s32.totalorder %s33, %s49
      %p51 = scmp.eq.s32.totalorder %s25, 0
      %p52 = por %p50, %p51
      %s54 = sadd.s32 %s53, 1
      %p57 = scmp.eq.s32.totalorder %s19, 1
      %p58 = scmp.ne.s32.totalorder %s53, %s55
      %p59 = scmp.eq.s32.totalorder %s19, 0
      %p60 = por %p58, %p59
      %p61 = scmp.ne.s32.totalorder %s53, %s55
      %p62 = scmp.eq.s32.totalorder %s24, 1
      %p63 = por %p61, %p62
      %p64 = scmp.ne.s32.totalorder %s55, %s56
      %p65 = scmp.eq.s32.totalorder %s24, 0
      %p66 = por %p64, %p65
      %p67 = scmp.ne.s32.totalorder %s55, %s56
      %p68 = scmp.eq.s32.totalorder %s25, 1
      %p69 = por %p67, %p68
      %p71 = scmp.ne.s32.totalorder %s56, %s70
      %p72 = scmp.eq.s32.totalorder %s25, 0
      %p73 = por %p71, %p72
      %s75 = sadd.s32 %s74, 1
      %p78 = scmp.eq.s32.totalorder %s19, 1
      %p79 = scmp.ne.s32.totalorder %s74, %s76
      %p80 = scmp.eq.s32.totalorder %s19, 0
      %p81 = por %p79, %p80
      %p82 = scmp.ne.s32.totalorder %s74, %s76
      %p83 = scmp.eq.s32.totalorder %s24, 1
      %p84 = por %p82, %p83
      %p85 = scmp.ne.s32.totalorder %s76, %s77
      %p86 = scmp.eq.s32.totalorder %s24, 0
      %p87 = por %p85, %p86
      %p88 = scmp.ne.s32.totalorder %s76, %s77
      %p89 = scmp.eq.s32.totalorder %s25, 1
      %p90 = por %p88, %p89
      %p92 = scmp.ne.s32.totalorder %s77, %s91
      %p93 = scmp.eq.s32.totalorder %s25, 0
      %p94 = por %p92, %p93
      %s96 = sadd.s32 %s95, 1
      %p99 = scmp.eq.s32.totalorder %s19, 1
      %p100 = scmp.ne.s32.totalorder %s95, %s97
      %p101 = scmp.eq.s32.totalorder %s19, 0
      %p102 = por %p100, %p101
      %p103 = scmp.ne.s32.totalorder %s95, %s97
      %p104 = scmp.eq.s32.totalorder %s24, 1
      %p105 = por %p103, %p104
      %p106 = scmp.ne.s32.totalorder %s97, %s98
      %p107 = scmp.eq.s32.totalorder %s24, 0
      %p108 = por %p106, %p107
      %p109 = scmp.ne.s32.totalorder %s97, %s98
      %p110 = scmp.eq.s32.totalorder %s25, 1
      %p111 = por %p109, %p110
      %p113 = scmp.ne.s32.totalorder %s98, %s112
      %p114 = scmp.eq.s32.totalorder %s25, 0
      %p115 = por %p113, %p114
      %s117 = sadd.s32 %s116, 1
      %p120 = scmp.eq.s32.totalorder %s19, 1
      %p121 = scmp.ne.s32.totalorder %s116, %s118
      %p122 = scmp.eq.s32.totalorder %s19, 0
      %p123 = por %p121, %p122
      %p124 = scmp.ne.s32.totalorder %s116, %s118
      %p125 = scmp.eq.s32.totalorder %s24, 1
      %p126 = por %p124, %p125
      %p127 = scmp.ne.s32.totalorder %s118, %s119
      %p128 = scmp.eq.s32.totalorder %s24, 0
      %p129 = por %p127, %p128
      %p130 = scmp.ne.s32.totalorder %s118, %s119
      %p131 = scmp.eq.s32.totalorder %s25, 1
      %p132 = por %p130, %p131
      %p134 = scmp.ne.s32.totalorder %s119, %s133
      %p135 = scmp.eq.s32.totalorder %s25, 0
      %p136 = por %p134, %p135
      %s138 = sadd.s32 %s137, 1
      %p141 = scmp.eq.s32.totalorder %s19, 1
      %p142 = scmp.ne.s32.totalorder %s137, %s139
      %p143 = scmp.eq.s32.totalorder %s19, 0
      %p144 = por %p142, %p143
      %p145 = scmp.ne.s32.totalorder %s137, %s139
      %p146 = scmp.eq.s32.totalorder %s24, 1
      %p147 = por %p145, %p146
      %p148 = scmp.ne.s32.totalorder %s139, %s140
      %p149 = scmp.eq.s32.totalorder %s24, 0
      %p150 = por %p148, %p149
      %p151 = scmp.ne.s32.totalorder %s139, %s140
      %p152 = scmp.eq.s32.totalorder %s25, 1
      %p153 = por %p151, %p152
      %p155 = scmp.ne.s32.totalorder %s140, %s154
      %p156 = scmp.eq.s32.totalorder %s25, 0
      %p157 = por %p155, %p156
      %s159 = sadd.s32 %s158, 1
      %p162 = scmp.eq.s32.totalorder %s19, 1
      %p163 = scmp.ne.s32.totalorder %s158, %s160
      %p164 = scmp.eq.s32.totalorder %s19, 0
      %p165 = por %p163, %p164
      %p166 = scmp.ne.s32.totalorder %s158, %s160
      %p167 = scmp.eq.s32.totalorder %s24, 1
      %p168 = por %p166, %p167
      %p169 = scmp.ne.s32.totalorder %s160, %s161
      %p170 = scmp.eq.s32.totalorder %s24, 0
      %p171 = por %p169, %p170
      %p172 = scmp.ne.s32.totalorder %s160, %s161
      %p173 = scmp.eq.s32.totalorder %s25, 1
      %p174 = por %p172, %p173
      %p176 = scmp.ne.s32.totalorder %s161, %s175
      %p177 = scmp.eq.s32.totalorder %s25, 0
      %p178 = por %p176, %p177
      %s179 = ssub.s32 %s19, %s26
      %p180 = scmp.eq.s32.totalorder %s179, 0
      %s182 = sadd.s32 %s181, 1
      %s183 = scalar_select %p180, %s181, %s182
      %p186 = pneg %p180
      %p187 = scmp.eq.s32.totalorder %s19, 1
      %p188 = por %p186, %p187
      %p189 = scmp.ne.s32.totalorder %s181, %s184
      %p190 = scmp.eq.s32.totalorder %s19, 0
      %p191 = por %p189, %p190
      %p192 = scmp.ne.s32.totalorder %s181, %s184
      %p193 = scmp.eq.s32.totalorder %s24, 1
      %p194 = por %p192, %p193
      %p195 = scmp.ne.s32.totalorder %s184, %s185
      %p196 = scmp.eq.s32.totalorder %s24, 0
      %p197 = por %p195, %p196
      %p198 = scmp.ne.s32.totalorder %s184, %s185
      %p199 = scmp.eq.s32.totalorder %s25, 1
      %p200 = por %p198, %p199
      %p202 = scmp.ne.s32.totalorder %s185, %s201
      %p203 = scmp.eq.s32.totalorder %s25, 0
      %p204 = por %p202, %p203
      %p205 = scmp.le.s32.totalorder 1, %s19
      %p206 = scmp.lt.s32.totalorder %s19, 3
      %p207 = pnand %p205, %p206
      %p208 = pneg %p207
      // Predicated region
      $region9: #{tpu_custom_call.1} parent=5 // pred_check
        _
      $region10: #{tpu_custom_call.1} parent=5 // pred_check_branch
        %210 = sbr.rel (%p207) target = $region12
      $region11: #{tpu_custom_call.1} parent=5 // pred_region
        %s211 = ssub.s32 %s19, 1
        // Predicated region
        $region13: #{tpu_custom_call.1} parent=11 // pred_check
          %p212 = pneg %p66
        $region14: #{tpu_custom_call.1} parent=11 // pred_check_branch
          %214 = sbr.rel (%p212) target = $region16
        $region15: #{tpu_custom_call.1} parent=11 // pred_region
          _
        $region16: #{tpu_custom_call.1} parent=11 // pred_fallthru
          _
        // Predicated region
        $region17: #{tpu_custom_call.1} parent=11 // pred_check
          %p215 = pneg %p87
        $region18: #{tpu_custom_call.1} parent=11 // pred_check_branch
          %217 = sbr.rel (%p215) target = $region20
        $region19: #{tpu_custom_call.1} parent=11 // pred_region
          _
        $region20: #{tpu_custom_call.1} parent=11 // pred_fallthru
          _
        // Predicated region
        $region21: #{tpu_custom_call.1} parent=11 // pred_check
          %p218 = pneg %p108
        $region22: #{tpu_custom_call.1} parent=11 // pred_check_branch
          %220 = sbr.rel (%p218) target = $region24
        $region23: #{tpu_custom_call.1} parent=11 // pred_region
          _
        $region24: #{tpu_custom_call.1} parent=11 // pred_fallthru
          _
        // Predicated region
        $region25: #{tpu_custom_call.1} parent=11 // pred_check
          %p221 = pneg %p129
        $region26: #{tpu_custom_call.1} parent=11 // pred_check_branch
          %223 = sbr.rel (%p221) target = $region28
        $region27: #{tpu_custom_call.1} parent=11 // pred_region
          _
        $region28: #{tpu_custom_call.1} parent=11 // pred_fallthru
          _
        // Predicated region
        $region29: #{tpu_custom_call.1} parent=11 // pred_check
          %p224 = pneg %p150
        $region30: #{tpu_custom_call.1} parent=11 // pred_check_branch
          %226 = sbr.rel (%p224) target = $region32
        $region31: #{tpu_custom_call.1} parent=11 // pred_region
          _
        $region32: #{tpu_custom_call.1} parent=11 // pred_fallthru
          _
        // Predicated region
        $region33: #{tpu_custom_call.1} parent=11 // pred_check
          %p227 = pneg %p171
        $region34: #{tpu_custom_call.1} parent=11 // pred_check_branch
          %229 = sbr.rel (%p227) target = $region36
        $region35: #{tpu_custom_call.1} parent=11 // pred_region
          _
        $region36: #{tpu_custom_call.1} parent=11 // pred_fallthru
          _
      $region12: #{tpu_custom_call.1} parent=5 // pred_fallthru
        _
      %p230 = scmp.lt.s32.totalorder %s19, 2
      // Predicated region
      $region37: #{tpu_custom_call.1} parent=5 // pred_check
        %p231 = pneg %p230
      $region38: #{tpu_custom_call.1} parent=5 // pred_check_branch
        %233 = sbr.rel (%p231) target = $region40
      $region39: #{tpu_custom_call.1} parent=5 // pred_region
        // Predicated region
        $region41: #{tpu_custom_call.1} parent=39 // pred_check
          %p234 = pneg %p39
        $region42: #{tpu_custom_call.1} parent=39 // pred_check_branch
          %236 = sbr.rel (%p234) target = $region44
        $region43: #{tpu_custom_call.1} parent=39 // pred_region
          %s237 = sand.u32 %s29, 1
          %s238 = scalar_lea.sflag [#allocation3], %s237
          %s239 = sand.u32 %s29, 1
          %s240 = smul.addr %s239, 64
          %s241 = scalar_lea.vmem [#allocation2], %s240
          %s243 = ssub.s32 1024, 1024
          %244 = vsyncadd %s238, %s243
          %s245 = smul.addr %s19, 8
          %s246 = smul.addr %s245, 128
          %s247 = scalar_lea.hbm %s0, %s246
          %s248 = sshll.u32 %s241, 4
          %s249 = int_to_ptr.vmem [resolvable:$true] %s248
          %254 = dma.hbm_to_vmem [thread:$0]  %s247, 1024, %s249, %s238, 256, 256, 16
        $region44: #{tpu_custom_call.1} parent=39 // pred_fallthru
          _
      $region40: #{tpu_custom_call.1} parent=5 // pred_fallthru
        _
      %p255 = scmp.le.s32.totalorder 1, %s19
      %p256 = scmp.lt.s32.totalorder %s19, 3
      %p257 = pnand %p255, %p256
      %p258 = pneg %p257
      // Predicated region
      $region45: #{tpu_custom_call.1} parent=5 // pred_check
        _
      $region46: #{tpu_custom_call.1} parent=5 // pred_check_branch
        %260 = sbr.rel (%p257) target = $region48
      $region47: #{tpu_custom_call.1} parent=5 // pred_region
        %s261 = ssub.s32 %s19, 1
        %s262 = sand.u32 %s32, 1
        %s263 = scalar_lea.sflag [#allocation3], %s262
        %s264 = sand.u32 %s32, 1
        %s265 = smul.addr %s264, 64
        %s266 = scalar_lea.vmem [#allocation2], %s265
        // Predicated region
        $region49: #{tpu_custom_call.1} parent=47 // pred_check
          %p267 = pneg %p45
        $region50: #{tpu_custom_call.1} parent=47 // pred_check_branch
          %269 = sbr.rel (%p267) target = $region52
        $region51: #{tpu_custom_call.1} parent=47 // pred_region
          %270 = dma.done %s263, 1024
        $region52: #{tpu_custom_call.1} parent=47 // pred_fallthru
          _
        %s271 = sand.u32 %s32, 1
        %s272 = scalar_lea.sflag [#allocation3], %s271
        %s273 = sand.u32 %s32, 1
        %s274 = smul.addr %s273, 64
        %s275 = scalar_lea.vmem [#allocation2], %s274
        %p276 = pneg %p45
        %p277 = pneg %p42
        %p278 = pneg %p66
        %p279 = pneg %p63
        %p280 = pneg %p87
        %p281 = pneg %p84
        %p282 = pneg %p108
        %p283 = pneg %p105
        %p284 = pneg %p129
        %p285 = pneg %p126
        %p286 = pneg %p150
        %p287 = pneg %p147
        %p288 = pneg %p171
        %p289 = pneg %p168
        %p290 = pneg %p197
        %p291 = pneg %p194
        %s292 = sand.u32 %s184, 1
        %s293 = scalar_lea.sflag [#allocation4], %s292
        %s294 = sand.u32 %s184, 1
        %s295 = scalar_lea.vmem [#allocation5], %s294
        %v296 = vld [vmem:[%s1] sm:$0xff]
        %v297 = vld [vmem:[%s1 + $0x8] sm:$0xff]
        %v298 = vld [vmem:[%s266] sm:$0xff]
        %v299 = vld [vmem:[%s266 + $0x8] sm:$0xff]
        %v300 = vld [vmem:[%s266 + $0x10] sm:$0xff]
        %v301 = vld [vmem:[%s266 + $0x18] sm:$0xff]
        %v302 = vld [vmem:[%s266 + $0x20] sm:$0xff]
        %v303 = vld [vmem:[%s266 + $0x28] sm:$0xff]
        %v304 = vld [vmem:[%s266 + $0x30] sm:$0xff]
        %v305 = vld [vmem:[%s266 + $0x38] sm:$0xff]
        %v306 = vld [vmem:[%s2] sm:$0xff]
        %v307 = vld [vmem:[%s2 + $0x8] sm:$0xff]
        %309 = vset.pattern.permute.xlu0 0
        %310 = vperm.xlu0 %309, %v306
        %v311 = vpop.permute.xlu0 %310
        %314 = vset.pattern.permute.xlu0 0
        %315 = vperm.xlu0 %314, %v307
        %v316 = vpop.permute.xlu0 %315
        %vm318 = vcmask 261120
        %v320 = vsel %vm318, %v296, 0
        %v323 = vsel %vm318, %v297, 0
        %325 = vmatprep.subr.mxu0 0.0
        %326 = vmatpush1.msra.mxu0 0.0
        %327 = vmatprep.subr.mxu0 0.0
        %328 = vmatpush1.msra.mxu0 0.0
        %329 = vmatprep.subr.mxu0 0.0
        %330 = vmatpush1.msra.mxu0 0.0
        %331 = vmatprep.subr.mxu0 0.0
        %332 = vmatpush1.msra.mxu0 0.0
        %333 = vmatprep.subr.mxu0 0.0
        %334 = vmatpush1.msra.mxu0 0.0
        %335 = vmatprep.subr.mxu0 0.0
        %336 = vmatpush1.msra.mxu0 0.0
        %337 = vmatprep.subr.mxu0 0.0
        %338 = vmatpush1.msra.mxu0 0.0
        %339 = vmatprep.subr.mxu0 0.0
        %340 = vmatpush1.msra.mxu0 0.0
        %341 = vmatprep.subr.mxu0 0.0
        %342 = vmatpush1.msra.mxu0 0.0
        %343 = vmatprep.subr.mxu0 0.0
        %344 = vmatpush1.msra.mxu0 0.0
        %345 = vmatprep.subr.mxu0 0.0
        %346 = vmatpush1.msra.mxu0 0.0
        %347 = vmatprep.subr.mxu0 0.0
        %348 = vmatpush1.msra.mxu0 0.0
        %349 = vmatprep.subr.mxu0 %v305
        %350 = vmatpush1.msra.mxu0 %v304
        %351 = vmatprep.subr.mxu0 %v303
        %352 = vmatpush1.msra.mxu0 %v302
        %353 = vmatprep.subr.mxu0 %v301
        %354 = vmatpush1.msra.mxu0 %v300
        %355 = vmatprep.subr.mxu0 %v299
        %356 = vmatpush1.msra.mxu0 %v298
        %357 = vmatprep.subr.mxu0 0.0
        %358 = vmatpush2.msra.mxu0 0.0
        %359 = vmatprep.subr.mxu0 0.0
        %360 = vmatpush2.msra.mxu0 0.0
        %361 = vmatprep.subr.mxu0 0.0
        %362 = vmatpush2.msra.mxu0 0.0
        %363 = vmatprep.subr.mxu0 0.0
        %364 = vmatpush2.msra.mxu0 0.0
        %365 = vmatprep.subr.mxu0 0.0
        %366 = vmatpush2.msra.mxu0 0.0
        %367 = vmatprep.subr.mxu0 0.0
        %368 = vmatpush2.msra.mxu0 0.0
        %369 = vmatprep.subr.mxu0 0.0
        %370 = vmatpush2.msra.mxu0 0.0
        %371 = vmatprep.subr.mxu0 0.0
        %372 = vmatpush2.msra.mxu0 0.0
        %373 = vmatprep.subr.mxu0 0.0
        %374 = vmatpush2.msra.mxu0 0.0
        %375 = vmatprep.subr.mxu0 0.0
        %376 = vmatpush2.msra.mxu0 0.0
        %377 = vmatprep.subr.mxu0 0.0
        %378 = vmatpush2.msra.mxu0 0.0
        %379 = vmatprep.subr.mxu0 0.0
        %380 = vmatpush2.msra.mxu0 0.0
        %381 = vmatprep.subr.mxu0 0.0
        %382 = vmatpush2.msra.mxu0 0.0
        %383 = vmatprep.subr.mxu0 0.0
        %384 = vmatpush2.msra.mxu0 0.0
        %385 = vmatprep.subr.mxu0 0.0
        %386 = vmatpush2.msra.mxu0 0.0
        %387 = vmatprep.subr.mxu0 0.0
        %388 = vmatpush2.msra.mxu0 0.0
        %389 = vmatprep.mubr.f32.mxu0 0.0
        %390 = vmatmul.mubr.f32.gmra.mxu0 %v320
        %v391 = vpop.f32.mrf.mxu0
        %v392 = vadd.f32 %v311, %v391
        %v393 = vpop.f32.mrf.mxu0
        %v394 = vadd.f32 %v311, %v393
        %395 = vmatprep.mubr.f32.mxu0 0.0
        %396 = vmatmul.mubr.f32.gmra.mxu0 %v323
        %v397 = vpop.f32.mrf.mxu0
        %v398 = vadd.f32 %v316, %v397
        %v399 = vpop.f32.mrf.mxu0
        %v400 = vadd.f32 %v316, %v399
        %401 = vdwg.mxu0
        %v402 = vlaneseq
        %v403 = vand.u32 %v402, 127
        %v404 = vadd.s32 %v403, 128
        %v405 = vand.u32 %v403, 15
        %v406 = vand.u32 %v404, 15
        %vm407 = vcmp.lt.s32.totalorder %v405, 15
        %vm408 = vcmp.lt.s32.totalorder %v406, 15
        %vm409 = vcmp.lt.s32.totalorder %v405, 14
        %vm410 = vcmp.lt.s32.totalorder %v406, 14
        %vm411 = vcmp.ge.s32.totalorder %v405, 1
        %vm412 = vcmp.ge.s32.totalorder %v406, 1
        %vm413 = vcmp.ge.s32.totalorder %v405, 2
        %vm414 = vcmp.ge.s32.totalorder %v406, 2
        %419 = vrot.lane.b32.xlu0 %v392, 127
        %v420 = vpop.permute.xlu0 %419
        %421 = vrot.lane.b32.xlu0 %v394, 127
        %v422 = vpop.permute.xlu0 %421
        %423 = vrot.lane.b32.xlu0 %v398, 127
        %v424 = vpop.permute.xlu0 %423
        %425 = vrot.lane.b32.xlu0 %v400, 127
        %v426 = vpop.permute.xlu0 %425
        %vm427 = vcmask 1039360
        %v428 = vsel %vm427, %v420, %v422
        %v429 = vsel %vm427, %v424, %v426
        %v434 = vsel %vm427, %v422, -inf
        %v435 = vsel %vm427, %v426, -inf
        %v436 = vsel %vm407, %v428, -inf
        %v437 = vsel %vm408, %v434, -inf
        %v438 = vsel %vm407, %v429, -inf
        %v439 = vsel %vm408, %v435, -inf
        %v440 = vmax.f32 %v392, %v436
        %v441 = vmax.f32 %v394, %v437
        %v442 = vmax.f32 %v398, %v438
        %v443 = vmax.f32 %v400, %v439
        %444 = vrot.lane.b32.xlu0 %v392, 126
        %v445 = vpop.permute.xlu0 %444
        %446 = vrot.lane.b32.xlu0 %v394, 126
        %v447 = vpop.permute.xlu0 %446
        %448 = vrot.lane.b32.xlu0 %v398, 126
        %v449 = vpop.permute.xlu0 %448
        %450 = vrot.lane.b32.xlu0 %v400, 126
        %v451 = vpop.permute.xlu0 %450
        %vm452 = vcmask 1031168
        %v453 = vsel %vm452, %v445, %v447
        %v454 = vsel %vm452, %v449, %v451
        %v459 = vsel %vm452, %v447, -inf
        %v460 = vsel %vm452, %v451, -inf
        %v461 = vsel %vm409, %v453, -inf
        %v462 = vsel %vm410, %v459, -inf
        %v463 = vsel %vm409, %v454, -inf
        %v464 = vsel %vm410, %v460, -inf
        %v465 = vmax.f32 %v440, %v461
        %v466 = vmax.f32 %v441, %v462
        %v467 = vmax.f32 %v442, %v463
        %v468 = vmax.f32 %v443, %v464
        %469 = vrot.lane.b32.xlu0 %v392, 1
        %v470 = vpop.permute.xlu0 %469
        %471 = vrot.lane.b32.xlu0 %v394, 1
        %v472 = vpop.permute.xlu0 %471
        %473 = vrot.lane.b32.xlu0 %v398, 1
        %v474 = vpop.permute.xlu0 %473
        %475 = vrot.lane.b32.xlu0 %v400, 1
        %v476 = vpop.permute.xlu0 %475
        %vm477 = vcmask 7168
        %v478 = vsel %vm477, %v470, %v472
        %v479 = vsel %vm477, %v474, %v476
        %v484 = vsel %vm477, -inf, %v470
        %v485 = vsel %vm477, -inf, %v474
        %v486 = vsel %vm411, %v484, -inf
        %v487 = vsel %vm412, %v478, -inf
        %v488 = vsel %vm411, %v485, -inf
        %v489 = vsel %vm412, %v479, -inf
        %v490 = vmax.f32 %v465, %v486
        %v491 = vmax.f32 %v466, %v487
        %v492 = vmax.f32 %v467, %v488
        %v493 = vmax.f32 %v468, %v489
        %494 = vrot.lane.b32.xlu0 %v392, 2
        %v495 = vpop.permute.xlu0 %494
        %496 = vrot.lane.b32.xlu0 %v394, 2
        %v497 = vpop.permute.xlu0 %496
        %498 = vrot.lane.b32.xlu0 %v398, 2
        %v499 = vpop.permute.xlu0 %498
        %500 = vrot.lane.b32.xlu0 %v400, 2
        %v501 = vpop.permute.xlu0 %500
        %vm502 = vcmask 15360
        %v503 = vsel %vm502, %v495, %v497
        %v504 = vsel %vm502, %v499, %v501
        %v509 = vsel %vm502, -inf, %v495
        %v510 = vsel %vm502, -inf, %v499
        %v511 = vsel %vm413, %v509, -inf
        %v512 = vsel %vm414, %v503, -inf
        %v513 = vsel %vm413, %v510, -inf
        %v514 = vsel %vm414, %v504, -inf
        %v515 = vmax.f32 %v490, %v511
        %v516 = vmax.f32 %v491, %v512
        %v517 = vmax.f32 %v492, %v513
        %v518 = vmax.f32 %v493, %v514
        %523 = vrot.lane.b32.xlu0 %v515, 112
        %v524 = vpop.permute.xlu0 %523
        %525 = vrot.lane.b32.xlu0 %v516, 112
        %v526 = vpop.permute.xlu0 %525
        %527 = vrot.lane.b32.xlu0 %v517, 112
        %v528 = vpop.permute.xlu0 %527
        %529 = vrot.lane.b32.xlu0 %v518, 112
        %v530 = vpop.permute.xlu0 %529
        %vm531 = vcmask 916480
        %v532 = vsel %vm531, %v524, %v526
        %v533 = vsel %vm531, %v528, %v530
        %v538 = vsel %vm531, %v526, -inf
        %v539 = vsel %vm531, %v530, -inf
        %v540 = vmax.f32 %v515, %v532
        %v541 = vmax.f32 %v516, %v538
        %v542 = vmax.f32 %v517, %v533
        %v543 = vmax.f32 %v518, %v539
        %544 = vrot.lane.b32.xlu0 %v515, 96
        %v545 = vpop.permute.xlu0 %544
        %546 = vrot.lane.b32.xlu0 %v516, 96
        %v547 = vpop.permute.xlu0 %546
        %548 = vrot.lane.b32.xlu0 %v517, 96
        %v549 = vpop.permute.xlu0 %548
        %550 = vrot.lane.b32.xlu0 %v518, 96
        %v551 = vpop.permute.xlu0 %550
        %vm552 = vcmask 785408
        %v553 = vsel %vm552, %v545, %v547
        %v554 = vsel %vm552, %v549, %v551
        %v559 = vsel %vm552, %v547, -inf
        %v560 = vsel %vm552, %v551, -inf
        %v561 = vmax.f32 %v540, %v553
        %v562 = vmax.f32 %v541, %v559
        %v563 = vmax.f32 %v542, %v554
        %v564 = vmax.f32 %v543, %v560
        %565 = vrot.lane.b32.xlu0 %v515, 16
        %v566 = vpop.permute.xlu0 %565
        %567 = vrot.lane.b32.xlu0 %v516, 16
        %v568 = vpop.permute.xlu0 %567
        %569 = vrot.lane.b32.xlu0 %v517, 16
        %v570 = vpop.permute.xlu0 %569
        %571 = vrot.lane.b32.xlu0 %v518, 16
        %v572 = vpop.permute.xlu0 %571
        %vm573 = vcmask 130048
        %v574 = vsel %vm573, %v566, %v568
        %v575 = vsel %vm573, %v570, %v572
        %v580 = vsel %vm573, -inf, %v566
        %v581 = vsel %vm573, -inf, %v570
        %v582 = vmax.f32 %v561, %v580
        %v583 = vmax.f32 %v562, %v574
        %v584 = vmax.f32 %v563, %v581
        %v585 = vmax.f32 %v564, %v575
        %586 = vrot.lane.b32.xlu0 %v515, 32
        %v587 = vpop.permute.xlu0 %586
        %588 = vrot.lane.b32.xlu0 %v516, 32
        %v589 = vpop.permute.xlu0 %588
        %590 = vrot.lane.b32.xlu0 %v517, 32
        %v591 = vpop.permute.xlu0 %590
        %592 = vrot.lane.b32.xlu0 %v518, 32
        %v593 = vpop.permute.xlu0 %592
        %v594 = vsel %vm318, %v587, %v589
        %v595 = vsel %vm318, %v591, %v593
        %v600 = vsel %vm318, -inf, %v587
        %v601 = vsel %vm318, -inf, %v591
        %v602 = vmax.f32 %v582, %v600
        %v603 = vmax.f32 %v583, %v594
        %v604 = vmax.f32 %v584, %v601
        %v605 = vmax.f32 %v585, %v595
        %610 = vrot.lane.b32.xlu0 %v602, 127
        %v611 = vpop.permute.xlu0 %610
        %612 = vrot.lane.b32.xlu0 %v603, 127
        %v613 = vpop.permute.xlu0 %612
        %614 = vrot.lane.b32.xlu0 %v604, 127
        %v615 = vpop.permute.xlu0 %614
        %616 = vrot.lane.b32.xlu0 %v605, 127
        %v617 = vpop.permute.xlu0 %616
        %v618 = vsel %vm427, %v611, %v613
        %v619 = vsel %vm427, %v615, %v617
        %v624 = vsel %vm427, %v613, -inf
        %v625 = vsel %vm427, %v617, -inf
        %v626 = vsel %vm407, %v618, -inf
        %v627 = vsel %vm408, %v624, -inf
        %v628 = vsel %vm407, %v619, -inf
        %v629 = vsel %vm408, %v625, -inf
        %v630 = vmax.f32 %v602, %v626
        %v631 = vmax.f32 %v603, %v627
        %v632 = vmax.f32 %v604, %v628
        %v633 = vmax.f32 %v605, %v629
        %634 = vrot.lane.b32.xlu0 %v602, 126
        %v635 = vpop.permute.xlu0 %634
        %636 = vrot.lane.b32.xlu0 %v603, 126
        %v637 = vpop.permute.xlu0 %636
        %638 = vrot.lane.b32.xlu0 %v604, 126
        %v639 = vpop.permute.xlu0 %638
        %640 = vrot.lane.b32.xlu0 %v605, 126
        %v641 = vpop.permute.xlu0 %640
        %v642 = vsel %vm452, %v635, %v637
        %v643 = vsel %vm452, %v639, %v641
        %v648 = vsel %vm452, %v637, -inf
        %v649 = vsel %vm452, %v641, -inf
        %v650 = vsel %vm409, %v642, -inf
        %v651 = vsel %vm410, %v648, -inf
        %v652 = vsel %vm409, %v643, -inf
        %v653 = vsel %vm410, %v649, -inf
        %v654 = vmax.f32 %v630, %v650
        %v655 = vmax.f32 %v631, %v651
        %v656 = vmax.f32 %v632, %v652
        %v657 = vmax.f32 %v633, %v653
        %658 = vrot.lane.b32.xlu0 %v602, 1
        %v659 = vpop.permute.xlu0 %658
        %660 = vrot.lane.b32.xlu0 %v603, 1
        %v661 = vpop.permute.xlu0 %660
        %662 = vrot.lane.b32.xlu0 %v604, 1
        %v663 = vpop.permute.xlu0 %662
        %664 = vrot.lane.b32.xlu0 %v605, 1
        %v665 = vpop.permute.xlu0 %664
        %v666 = vsel %vm477, %v659, %v661
        %v667 = vsel %vm477, %v663, %v665
        %v672 = vsel %vm477, -inf, %v659
        %v673 = vsel %vm477, -inf, %v663
        %v674 = vsel %vm411, %v672, -inf
        %v675 = vsel %vm412, %v666, -inf
        %v676 = vsel %vm411, %v673, -inf
        %v677 = vsel %vm412, %v667, -inf
        %v678 = vmax.f32 %v654, %v674
        %v679 = vmax.f32 %v655, %v675
        %v680 = vmax.f32 %v656, %v676
        %v681 = vmax.f32 %v657, %v677
        %682 = vrot.lane.b32.xlu0 %v602, 2
        %v683 = vpop.permute.xlu0 %682
        %684 = vrot.lane.b32.xlu0 %v603, 2
        %v685 = vpop.permute.xlu0 %684
        %686 = vrot.lane.b32.xlu0 %v604, 2
        %v687 = vpop.permute.xlu0 %686
        %688 = vrot.lane.b32.xlu0 %v605, 2
        %v689 = vpop.permute.xlu0 %688
        %v690 = vsel %vm502, %v683, %v685
        %v691 = vsel %vm502, %v687, %v689
        %v696 = vsel %vm502, -inf, %v683
        %v697 = vsel %vm502, -inf, %v687
        %v698 = vsel %vm413, %v696, -inf
        %v699 = vsel %vm414, %v690, -inf
        %v700 = vsel %vm413, %v697, -inf
        %v701 = vsel %vm414, %v691, -inf
        %v702 = vmax.f32 %v678, %v698
        %v703 = vmax.f32 %v679, %v699
        %v704 = vmax.f32 %v680, %v700
        %v705 = vmax.f32 %v681, %v701
        %710 = vrot.lane.b32.xlu0 %v702, 112
        %v711 = vpop.permute.xlu0 %710
        %712 = vrot.lane.b32.xlu0 %v703, 112
        %v713 = vpop.permute.xlu0 %712
        %714 = vrot.lane.b32.xlu0 %v704, 112
        %v715 = vpop.permute.xlu0 %714
        %716 = vrot.lane.b32.xlu0 %v705, 112
        %v717 = vpop.permute.xlu0 %716
        %v718 = vsel %vm531, %v711, %v713
        %v719 = vsel %vm531, %v715, %v717
        %v724 = vsel %vm531, %v713, -inf
        %v725 = vsel %vm531, %v717, -inf
        %v726 = vmax.f32 %v702, %v718
        %v727 = vmax.f32 %v703, %v724
        %v728 = vmax.f32 %v704, %v719
        %v729 = vmax.f32 %v705, %v725
        %730 = vrot.lane.b32.xlu0 %v702, 96
        %v731 = vpop.permute.xlu0 %730
        %732 = vrot.lane.b32.xlu0 %v703, 96
        %v733 = vpop.permute.xlu0 %732
        %734 = vrot.lane.b32.xlu0 %v704, 96
        %v735 = vpop.permute.xlu0 %734
        %736 = vrot.lane.b32.xlu0 %v705, 96
        %v737 = vpop.permute.xlu0 %736
        %v738 = vsel %vm552, %v731, %v733
        %v739 = vsel %vm552, %v735, %v737
        %v744 = vsel %vm552, %v733, -inf
        %v745 = vsel %vm552, %v737, -inf
        %v746 = vmax.f32 %v726, %v738
        %v747 = vmax.f32 %v727, %v744
        %v748 = vmax.f32 %v728, %v739
        %v749 = vmax.f32 %v729, %v745
        %750 = vrot.lane.b32.xlu0 %v702, 16
        %v751 = vpop.permute.xlu0 %750
        %752 = vrot.lane.b32.xlu0 %v703, 16
        %v753 = vpop.permute.xlu0 %752
        %754 = vrot.lane.b32.xlu0 %v704, 16
        %v755 = vpop.permute.xlu0 %754
        %756 = vrot.lane.b32.xlu0 %v705, 16
        %v757 = vpop.permute.xlu0 %756
        %v758 = vsel %vm573, %v751, %v753
        %v759 = vsel %vm573, %v755, %v757
        %v764 = vsel %vm573, -inf, %v751
        %v765 = vsel %vm573, -inf, %v755
        %v766 = vmax.f32 %v746, %v764
        %v767 = vmax.f32 %v747, %v758
        %v768 = vmax.f32 %v748, %v765
        %v769 = vmax.f32 %v749, %v759
        %770 = vrot.lane.b32.xlu0 %v702, 32
        %v771 = vpop.permute.xlu0 %770
        %772 = vrot.lane.b32.xlu0 %v703, 32
        %v773 = vpop.permute.xlu0 %772
        %774 = vrot.lane.b32.xlu0 %v704, 32
        %v775 = vpop.permute.xlu0 %774
        %776 = vrot.lane.b32.xlu0 %v705, 32
        %v777 = vpop.permute.xlu0 %776
        %v778 = vsel %vm318, %v771, %v773
        %v779 = vsel %vm318, %v775, %v777
        %v784 = vsel %vm318, -inf, %v771
        %v785 = vsel %vm318, -inf, %v775
        %v786 = vmax.f32 %v766, %v784
        %v787 = vmax.f32 %v767, %v778
        %v788 = vmax.f32 %v768, %v785
        %v789 = vmax.f32 %v769, %v779
        %794 = vrot.lane.b32.xlu0 %v786, 127
        %v795 = vpop.permute.xlu0 %794
        %796 = vrot.lane.b32.xlu0 %v787, 127
        %v797 = vpop.permute.xlu0 %796
        %798 = vrot.lane.b32.xlu0 %v788, 127
        %v799 = vpop.permute.xlu0 %798
        %800 = vrot.lane.b32.xlu0 %v789, 127
        %v801 = vpop.permute.xlu0 %800
        %v802 = vsel %vm427, %v795, %v797
        %v803 = vsel %vm427, %v799, %v801
        %v808 = vsel %vm427, %v797, -inf
        %v809 = vsel %vm427, %v801, -inf
        %v810 = vsel %vm407, %v802, -inf
        %v811 = vsel %vm408, %v808, -inf
        %v812 = vsel %vm407, %v803, -inf
        %v813 = vsel %vm408, %v809, -inf
        %v814 = vmax.f32 %v786, %v810
        %v815 = vmax.f32 %v787, %v811
        %v816 = vmax.f32 %v788, %v812
        %v817 = vmax.f32 %v789, %v813
        %818 = vrot.lane.b32.xlu0 %v786, 126
        %v819 = vpop.permute.xlu0 %818
        %820 = vrot.lane.b32.xlu0 %v787, 126
        %v821 = vpop.permute.xlu0 %820
        %822 = vrot.lane.b32.xlu0 %v788, 126
        %v823 = vpop.permute.xlu0 %822
        %824 = vrot.lane.b32.xlu0 %v789, 126
        %v825 = vpop.permute.xlu0 %824
        %v826 = vsel %vm452, %v819, %v821
        %v827 = vsel %vm452, %v823, %v825
        %v832 = vsel %vm452, %v821, -inf
        %v833 = vsel %vm452, %v825, -inf
        %v834 = vsel %vm409, %v826, -inf
        %v835 = vsel %vm410, %v832, -inf
        %v836 = vsel %vm409, %v827, -inf
        %v837 = vsel %vm410, %v833, -inf
        %v838 = vmax.f32 %v814, %v834
        %v839 = vmax.f32 %v815, %v835
        %v840 = vmax.f32 %v816, %v836
        %v841 = vmax.f32 %v817, %v837
        %842 = vrot.lane.b32.xlu0 %v786, 1
        %v843 = vpop.permute.xlu0 %842
        %844 = vrot.lane.b32.xlu0 %v787, 1
        %v845 = vpop.permute.xlu0 %844
        %846 = vrot.lane.b32.xlu0 %v788, 1
        %v847 = vpop.permute.xlu0 %846
        %848 = vrot.lane.b32.xlu0 %v789, 1
        %v849 = vpop.permute.xlu0 %848
        %v850 = vsel %vm477, %v843, %v845
        %v851 = vsel %vm477, %v847, %v849
        %v856 = vsel %vm477, -inf, %v843
        %v857 = vsel %vm477, -inf, %v847
        %v858 = vsel %vm411, %v856, -inf
        %v859 = vsel %vm412, %v850, -inf
        %v860 = vsel %vm411, %v857, -inf
        %v861 = vsel %vm412, %v851, -inf
        %v862 = vmax.f32 %v838, %v858
        %v863 = vmax.f32 %v839, %v859
        %v864 = vmax.f32 %v840, %v860
        %v865 = vmax.f32 %v841, %v861
        %866 = vrot.lane.b32.xlu0 %v786, 2
        %v867 = vpop.permute.xlu0 %866
        %868 = vrot.lane.b32.xlu0 %v787, 2
        %v869 = vpop.permute.xlu0 %868
        %870 = vrot.lane.b32.xlu0 %v788, 2
        %v871 = vpop.permute.xlu0 %870
        %872 = vrot.lane.b32.xlu0 %v789, 2
        %v873 = vpop.permute.xlu0 %872
        %v874 = vsel %vm502, %v867, %v869
        %v875 = vsel %vm502, %v871, %v873
        %v880 = vsel %vm502, -inf, %v867
        %v881 = vsel %vm502, -inf, %v871
        %v882 = vsel %vm413, %v880, -inf
        %v883 = vsel %vm414, %v874, -inf
        %v884 = vsel %vm413, %v881, -inf
        %v885 = vsel %vm414, %v875, -inf
        %v886 = vmax.f32 %v862, %v882
        %v887 = vmax.f32 %v863, %v883
        %v888 = vmax.f32 %v864, %v884
        %v889 = vmax.f32 %v865, %v885
        %894 = vrot.lane.b32.xlu0 %v886, 112
        %v895 = vpop.permute.xlu0 %894
        %896 = vrot.lane.b32.xlu0 %v887, 112
        %v897 = vpop.permute.xlu0 %896
        %898 = vrot.lane.b32.xlu0 %v888, 112
        %v899 = vpop.permute.xlu0 %898
        %900 = vrot.lane.b32.xlu0 %v889, 112
        %v901 = vpop.permute.xlu0 %900
        %v902 = vsel %vm531, %v895, %v897
        %v903 = vsel %vm531, %v899, %v901
        %v908 = vsel %vm531, %v897, -inf
        %v909 = vsel %vm531, %v901, -inf
        %v910 = vmax.f32 %v886, %v902
        %v911 = vmax.f32 %v887, %v908
        %v912 = vmax.f32 %v888, %v903
        %v913 = vmax.f32 %v889, %v909
        %914 = vrot.lane.b32.xlu0 %v886, 96
        %v915 = vpop.permute.xlu0 %914
        %916 = vrot.lane.b32.xlu0 %v887, 96
        %v917 = vpop.permute.xlu0 %916
        %918 = vrot.lane.b32.xlu0 %v888, 96
        %v919 = vpop.permute.xlu0 %918
        %920 = vrot.lane.b32.xlu0 %v889, 96
        %v921 = vpop.permute.xlu0 %920
        %v922 = vsel %vm552, %v915, %v917
        %v923 = vsel %vm552, %v919, %v921
        %v928 = vsel %vm552, %v917, -inf
        %v929 = vsel %vm552, %v921, -inf
        %v930 = vmax.f32 %v910, %v922
        %v931 = vmax.f32 %v911, %v928
        %v932 = vmax.f32 %v912, %v923
        %v933 = vmax.f32 %v913, %v929
        %934 = vrot.lane.b32.xlu0 %v886, 16
        %v935 = vpop.permute.xlu0 %934
        %936 = vrot.lane.b32.xlu0 %v887, 16
        %v937 = vpop.permute.xlu0 %936
        %938 = vrot.lane.b32.xlu0 %v888, 16
        %v939 = vpop.permute.xlu0 %938
        %940 = vrot.lane.b32.xlu0 %v889, 16
        %v941 = vpop.permute.xlu0 %940
        %v942 = vsel %vm573, %v935, %v937
        %v943 = vsel %vm573, %v939, %v941
        %v948 = vsel %vm573, -inf, %v935
        %v949 = vsel %vm573, -inf, %v939
        %v950 = vmax.f32 %v930, %v948
        %v951 = vmax.f32 %v931, %v942
        %v952 = vmax.f32 %v932, %v949
        %v953 = vmax.f32 %v933, %v943
        %954 = vrot.lane.b32.xlu0 %v886, 32
        %v955 = vpop.permute.xlu0 %954
        %956 = vrot.lane.b32.xlu0 %v887, 32
        %v957 = vpop.permute.xlu0 %956
        %958 = vrot.lane.b32.xlu0 %v888, 32
        %v959 = vpop.permute.xlu0 %958
        %960 = vrot.lane.b32.xlu0 %v889, 32
        %v961 = vpop.permute.xlu0 %960
        %v962 = vsel %vm318, %v955, %v957
        %v963 = vsel %vm318, %v959, %v961
        %v968 = vsel %vm318, -inf, %v955
        %v969 = vsel %vm318, -inf, %v959
        %v970 = vmax.f32 %v950, %v968
        %v971 = vmax.f32 %v951, %v962
        %v972 = vmax.f32 %v952, %v969
        %v973 = vmax.f32 %v953, %v963
        %v974 = vadd.f32 %v392, %v394
        %975 = vadd.xlane.f32.xlu0 %v974
        %v976 = vpop.xlane.xlu0 %975
        %v977 = vadd.f32 %v398, %v400
        %978 = vadd.xlane.f32.xlu0 %v977
        %v979 = vpop.xlane.xlu0 %978
        %v980 = vadd.f32 %v602, %v603
        %981 = vadd.xlane.f32.xlu0 %v980
        %v982 = vpop.xlane.xlu0 %981
        %v983 = vadd.f32 %v604, %v605
        %984 = vadd.xlane.f32.xlu0 %v983
        %v985 = vpop.xlane.xlu0 %984
        %v986 = vadd.f32 %v786, %v787
        %987 = vadd.xlane.f32.xlu0 %v986
        %v988 = vpop.xlane.xlu0 %987
        %v989 = vadd.f32 %v788, %v789
        %990 = vadd.xlane.f32.xlu0 %v989
        %v991 = vpop.xlane.xlu0 %990
        %v992 = vadd.f32 %v970, %v971
        %993 = vadd.xlane.f32.xlu0 %v992
        %v994 = vpop.xlane.xlu0 %993
        %v995 = vadd.f32 %v972, %v973
        %996 = vadd.xlane.f32.xlu0 %v995
        %v997 = vpop.xlane.xlu0 %996
        %v998 = vmul.f32 %v976, 0.00390625
        %v999 = vmul.f32 %v979, 0.00390625
        %v1000 = vmul.f32 %v982, 0.00390625
        %v1001 = vmul.f32 %v985, 0.00390625
        %v1002 = vmul.f32 %v988, 0.00390625
        %v1003 = vmul.f32 %v991, 0.00390625
        %v1004 = vmul.f32 %v994, 0.00390625
        %v1005 = vmul.f32 %v997, 0.00390625
        %v1006 = vld [vmem:[%s3] sm:$0xff]
        %v1007 = vld [vmem:[%s3 + $0x8] sm:$0xff]
        %v1008 = vld [vmem:[%s3 + $0x10] sm:$0xff]
        %v1009 = vld [vmem:[%s3 + $0x18] sm:$0xff]
        %v1010 = vld [vmem:[%s3 + $0x20] sm:$0xff]
        %v1011 = vld [vmem:[%s3 + $0x28] sm:$0xff]
        %v1012 = vld [vmem:[%s3 + $0x30] sm:$0xff]
        %v1013 = vld [vmem:[%s3 + $0x38] sm:$0xff]
        %1015 = vset.pattern.permute.xlu0 0
        %1016 = vperm.xlu0 %1015, %v998
        %v1017 = vpop.permute.xlu0 %1016
        %1020 = vset.pattern.permute.xlu0 0
        %1021 = vperm.xlu0 %1020, %v999
        %v1022 = vpop.permute.xlu0 %1021
        %1025 = vset.pattern.permute.xlu0 0
        %1026 = vperm.xlu0 %1025, %v1000
        %v1027 = vpop.permute.xlu0 %1026
        %1030 = vset.pattern.permute.xlu0 0
        %1031 = vperm.xlu0 %1030, %v1001
        %v1032 = vpop.permute.xlu0 %1031
        %1035 = vset.pattern.permute.xlu0 0
        %1036 = vperm.xlu0 %1035, %v1002
        %v1037 = vpop.permute.xlu0 %1036
        %1040 = vset.pattern.permute.xlu0 0
        %1041 = vperm.xlu0 %1040, %v1003
        %v1042 = vpop.permute.xlu0 %1041
        %1045 = vset.pattern.permute.xlu0 0
        %1046 = vperm.xlu0 %1045, %v1004
        %v1047 = vpop.permute.xlu0 %1046
        %1050 = vset.pattern.permute.xlu0 0
        %1051 = vperm.xlu0 %1050, %v1005
        %v1052 = vpop.permute.xlu0 %1051
        %v1054 = vmul.f32 %v1006, %v1017
        %v1055 = vmul.f32 %v1007, %v1022
        %v1056 = vmul.f32 %v1008, %v1027
        %v1057 = vmul.f32 %v1009, %v1032
        %v1058 = vmul.f32 %v1010, %v1037
        %v1059 = vmul.f32 %v1011, %v1042
        %v1060 = vmul.f32 %v1012, %v1047
        %v1061 = vmul.f32 %v1013, %v1052
        %v1062 = vsel %vm318, %v1054, 0.0
        %v1063 = vsel %vm318, %v1055, 0.0
        %v1064 = vadd.f32 %v1062, %v1063
        %v1065 = vsel %vm318, %v1056, 0.0
        %v1066 = vadd.f32 %v1064, %v1065
        %v1067 = vsel %vm318, %v1057, 0.0
        %v1068 = vadd.f32 %v1066, %v1067
        %v1069 = vsel %vm318, %v1058, 0.0
        %v1070 = vadd.f32 %v1068, %v1069
        %v1071 = vsel %vm318, %v1059, 0.0
        %v1072 = vadd.f32 %v1070, %v1071
        %v1073 = vsel %vm318, %v1060, 0.0
        %v1074 = vadd.f32 %v1072, %v1073
        %v1075 = vsel %vm318, %v1061, 0.0
        %v1076 = vadd.f32 %v1074, %v1075
        %v1077 = vrot.slane %v1076, 4
        %v1078 = vadd.f32 %v1076, %v1077
        %v1079 = vrot.slane %v1078, 2
        %v1080 = vadd.f32 %v1078, %v1079
        %v1081 = vrot.slane %v1080, 1
        %v1082 = vadd.f32 %v1080, %v1081
        %v1083 = vld [vmem:[%s4] sm:$0x1]
        %v1084 = vadd.f32 %v1082, %v1083
        %v1085 = vld [vmem:[%s5] sm:$0x3]
        %v1086 = vlaneseq
        %v1087 = vshrl.u32 %v1086, 7
        %v1088 = vsub.s32 0, %v1087
        %v1089 = vrot.slane %v1084, %v1088
        %v1090 = vmul.f32 %v1085, %v1089
        %vm1091 = vcmask 254976
        %v1092 = vsel %vm1091, %v1090, 0.0
        %1093 = vadd.xlane.f32.xlu0 %v1092
        %v1094 = vpop.xlane.xlu0 %1093
        %v1095 = vmax.f32 %v1094, 0.0
        %v1096 = vld [vmem:[%s6] sm:$0x3]
        %v1097 = vmul.f32 %v1096, %v1095
        %v1098 = vsel %vm1091, %v1097, 0.0
        %v1099 = vrot.slane %v1098, 4
        %v1100 = vadd.f32 %v1098, %v1099
        %v1101 = vrot.slane %v1100, 2
        %v1102 = vadd.f32 %v1100, %v1101
        %v1103 = vrot.slane %v1102, 1
        %v1104 = vadd.f32 %v1102, %v1103
        %v1105 = vxor.u32 %v1104, 2147483648
        %v1106 = vmul.f32 %v1105, 1.442695
        %v1107 = vpow.pop %v1106
        %v1108 = vadd.f32 %v1107, 1.0
        %v1109 = vrcp.pop %v1108
        %v1110 = vmul.f32 1.0, %v1109
        %vm1111 = vcmask 253952
        %1112 = vst.msk [vmem:[%s295] sm:$0x1] %vm1111, %v1110
        %s1113 = sand.u32 %s184, 1
        %s1114 = scalar_lea.sflag [#allocation4], %s1113
        %s1115 = sand.u32 %s184, 1
        %s1116 = scalar_lea.vmem [#allocation5], %s1115
        // Predicated region
        $region53: #{tpu_custom_call.1} parent=47 // pred_check
          %p1117 = pneg %p194
        $region54: #{tpu_custom_call.1} parent=47 // pred_check_branch
          %1119 = sbr.rel (%p1117) target = $region56
        $region55: #{tpu_custom_call.1} parent=47 // pred_region
          %s1121 = ssub.s32 16, 16
          %1122 = vsyncadd %s1114, %s1121
          %s1123 = smul.addr %s24, 16
          %s1124 = scalar_lea.hbm %s7, %s1123
          %s1126 = sshll.u32 %s1116, 4
          %s1127 = int_to_ptr.vmem [resolvable:$true] %s1126
          %1129 = dma.vmem_to_hbm [thread:$0]  %s1127, 16, %s1124, %s1114
        $region56: #{tpu_custom_call.1} parent=47 // pred_fallthru
          _
      $region48: #{tpu_custom_call.1} parent=5 // pred_fallthru
        _
      %p1130 = scmp.le.s32.totalorder 2, %s19
      // Predicated region
      $region57: #{tpu_custom_call.1} parent=5 // pred_check
        %p1131 = pneg %p1130
      $region58: #{tpu_custom_call.1} parent=5 // pred_check_branch
        %1133 = sbr.rel (%p1131) target = $region60
      $region59: #{tpu_custom_call.1} parent=5 // pred_region
        %s1134 = ssub.s32 %s19, 2
        // Predicated region
        $region61: #{tpu_custom_call.1} parent=59 // pred_check
          %p1135 = pneg %p200
        $region62: #{tpu_custom_call.1} parent=59 // pred_check_branch
          %1137 = sbr.rel (%p1135) target = $region64
        $region63: #{tpu_custom_call.1} parent=59 // pred_region
          %s1138 = sand.u32 %s185, 1
          %s1139 = scalar_lea.sflag [#allocation4], %s1138
          %s1140 = sand.u32 %s185, 1
          %s1141 = scalar_lea.vmem [#allocation5], %s1140
          %1142 = dma.done %s1139, 16
        $region64: #{tpu_custom_call.1} parent=59 // pred_fallthru
          _
      $region60: #{tpu_custom_call.1} parent=5 // pred_fallthru
        _
    $region6: #{tpu_custom_call.1} parent=1 // loop_footer
      %s23 = sadd.s32 1, %s19
    $region7: #{tpu_custom_call.1} parent=1 // loop_footer_branch
      %18 = sbr.rel target = $region3
    $region8: #{tpu_custom_call.1} parent=1 // loop_exit
      _
    %1143 = vsyncpa [#allocation3], 1
    %s1144 = scalar_lea.sflag [#allocation3], 1
    %1145 = vsyncpa %s1144, 1
    %1146 = vsyncpa [#allocation4], 1
    %s1147 = scalar_lea.sflag [#allocation4], 1
    %1148 = vsyncpa %s1147, 1

</llo_original>
